<compile_context>
chip_gen: v6e
topology: v6e:2x2x1
jax: 0.10.0
libtpu: 0.0.40
codegen_flags: <defaults>
</compile_context>

<pallas_src>
import math
import functools

import jax
import jax.numpy as jnp
from jax import lax
from jax.experimental import pallas as pl
from jax.experimental.pallas import tpu as pltpu


def _round_up(x: int, m: int) -> int:
    return ((x + m - 1) // m) * m


def _vmem_capacity_bytes() -> int:
    """Per-TensorCore VMEM capacity; conservative fallback if the query fails."""
    try:
        cap = getattr(pltpu.get_tpu_info(), "vmem_capacity_bytes", None)
        if cap:
            return int(cap)
    except Exception:
        pass
    return 64 << 20  # v7x per-TC VMEM: the smallest of v5e/v6e/v7x


# --------------------------------------------------------------------------- #
# Path 1: small vocab -> VMEM-resident bf16 table, vocab-chunked one-hot MXU gather.
# --------------------------------------------------------------------------- #
def _onehot_kernel(ids_ref, emb_ref, pe_ref, out_ref, acc_ref, *,
                   scale, n_chunks, vocab_chunk):
    """One (row, token-tile) slab of TS tokens.

    ids_ref : (1, TS, 1) int32   token ids (tokens on sublanes)
    emb_ref : (Vp, D)    bf16    full (padded) embedding table, VMEM-resident
    pe_ref  : (TS, D)    f32     positional-encoding rows for this tile
    out_ref : (1, TS, D) out_dtype
    acc_ref : (TS, D)    f32     scratch accumulator (bounds vreg pressure)
    """
    ids_col = ids_ref[0]                          # (TS, 1), ids on sublanes
    ts = ids_col.shape[0]
    acc_ref[...] = jnp.zeros_like(acc_ref)

    def gather_chunk(c, carry):
        base = c * vocab_chunk
        if not isinstance(base, int):
            base = pl.multiple_of(base, 128)
        vidx = lax.broadcasted_iota(jnp.int32, (ts, vocab_chunk), 1) + base
        onehot = (vidx == ids_col).astype(emb_ref.dtype)       # bf16: exact 0/1 select
        acc_ref[...] += jnp.dot(onehot, emb_ref[pl.ds(base, vocab_chunk), :],
                                preferred_element_type=jnp.float32)
        return carry

    if n_chunks == 1:
        gather_chunk(0, 0)
    else:
        lax.fori_loop(0, n_chunks, gather_chunk, 0, unroll=n_chunks <= 8)

    # Fused sqrt(d_model) scale + PE add; dense (TS, D) store.
    out_ref[0] = (acc_ref[...] * scale + pe_ref[...]).astype(out_ref.dtype)


# --------------------------------------------------------------------------- #
# Path 2: large vocab -> table stays in HBM, windowed per-row DMA gather.
# --------------------------------------------------------------------------- #
def _dma_gather_kernel(ids_ref, emb_hbm, pe_ref, out_ref, gbuf, sems, *,
                       scale, ts, row_len, nq):
    """ids_ref : (rows*row_len,) int32 in SMEM (scalar-prefetched flat token ids)
    emb_hbm : (V, D) HBM ref (memory_space=pl.ANY)
    pe_ref  : (TS, D) f32 VMEM tile
    out_ref : (1, TS, D) out_dtype
    gbuf    : (TS, D) VMEM scratch (gathered embedding rows)
    sems    : (NQ,) DMA semaphores (window of outstanding row copies)
    """
    s = pl.program_id(0)
    b = pl.program_id(1)
    base = b * row_len + s * ts

    def row_copy(t, tok):
        # For .wait() only the shapes and the semaphore matter, so `tok` can be 0 there.
        return pltpu.make_async_copy(emb_hbm.at[pl.ds(tok, 1), :],
                                     gbuf.at[pl.ds(t, 1), :],
                                     sems.at[t & (nq - 1)])

    # Prime the window (nq is a small power of two; static unrolled loop).
    for t in range(min(nq, ts)):
        row_copy(t, ids_ref[base + t]).start()

    @pl.loop(0, ts)
    def _(t):
        row_copy(t, 0).wait()                    # row t has landed in gbuf[t]

        @pl.when(t + nq < ts)
        def _():
            row_copy(t + nq, ids_ref[base + t + nq]).start()

    out_ref[0] = (gbuf[...].astype(jnp.float32) * scale
                  + pe_ref[...]).astype(out_ref.dtype)


# --------------------------------------------------------------------------- #
# Wrapper
# --------------------------------------------------------------------------- #
def transformer_embedding(token_ids, emb_table, pe_table, *,
                          scale_embedding=True,
                          out_dtype=jnp.float32,
                          seq_tile=256,
                          vocab_chunk=512,
                          onehot_vocab_cutoff=2048,
                          gather="auto",
                          dma_window=8):
    """TransformerEmbedding forward (eval mode: dropout = identity).

    token_ids : [B, S] int     -> returns [B, S, D] of out_dtype
    emb_table : [V, D]           nn.Embedding weight
    pe_table  : [max_len, D]     positional table (sinusoidal buffer or learned
                                 position-embedding weight; positions = arange(S))
    gather    : "auto" | "onehot" | "dma"
    """
    B, S = token_ids.shape
    V, D = emb_table.shape
    if S > pe_table.shape[0]:
        raise ValueError(f"seq_len={S} exceeds positional-encoding max_len={pe_table.shape[0]}")
    scale = float(math.sqrt(D)) if scale_embedding else 1.0
    out_dtype = jnp.dtype(out_dtype)
    out_bytes = out_dtype.itemsize
    unit = 16 if out_bytes < 4 else 8            # sublane tile of the output dtype
    seq_tile = max(unit, _round_up(int(seq_tile), unit))

    # ---- token-axis layout: (rows, cols) of ids matched with (cols, D) PE rows ------ #
    # Short sequences: flatten (B, S) -> one token axis (dense MXU/sublane tiles,
    # amortized grid-step overhead); PE is tiled per token (cheap in this regime).
    # Long sequences: keep (batch, seq) so the PE tile is shared across the batch.
    s_pad8 = _round_up(S, 8)
    ids = jnp.clip(token_ids.astype(jnp.int32), 0, V - 1)
    pe_s = pe_table[:S].astype(jnp.float32)

    flatten = (s_pad8 < seq_tile) and (B * s_pad8 * D * 4 <= (32 << 20))
    if flatten:
        ids_p = jnp.pad(ids, ((0, 0), (0, s_pad8 - S)))           # (B, s_pad8)
        pe_p = jnp.pad(pe_s, ((0, s_pad8 - S), (0, 0)))           # (s_pad8, D)
        rows, cols = 1, B * s_pad8
        ids2 = ids_p.reshape(1, cols)
        pe2 = jnp.tile(pe_p, (B, 1))                              # (cols, D)
    else:
        rows, cols = B, S
        ids2, pe2 = ids, pe_s

    ts = min(seq_tile, _round_up(cols, unit))
    cols_pad = _round_up(cols, ts)
    if cols_pad != cols:
        ids2 = jnp.pad(ids2, ((0, 0), (0, cols_pad - cols)))
        pe2 = jnp.pad(pe2, ((0, cols_pad - cols), (0, 0)))
    grid = (cols_pad // ts, rows)                # rows innermost -> PE tile reused

    # ---- generation-aware per-TensorCore VMEM budget --------------------------------- #
    vmem_cap = _vmem_capacity_bytes()
    vmem_ceiling = max(vmem_cap - (16 << 20), vmem_cap // 2)      # ~48MiB v7x, ~112MiB v5e/v6e
    resident_cutoff = max(vmem_cap - (24 << 20), vmem_cap // 2)   # table-residency budget

    vc = max(128, min(int(vocab_chunk), _round_up(V, 128)))
    v_pad = _round_up(V, vc)
    table_bytes = v_pad * D * 2                                   # bf16, single-buffered
    common_tiles = 2 * ts * D * 4 + 2 * ts * D * out_bytes        # pe + out (double-buffered)
    onehot_bytes = (table_bytes + common_tiles
                    + 2 * ts * 128 * 4                            # ids block pads to 128 lanes
                    + ts * D * 4                                  # f32 accumulator scratch
                    + 3 * ts * vc * 4                             # one-hot temporaries headroom
                    + (2 << 20))
    dma_bytes = common_tiles + ts * D * jnp.dtype(emb_table.dtype).itemsize + (2 << 20)

    if gather == "auto":
        use_dma = (V > onehot_vocab_cutoff) or (onehot_bytes > resident_cutoff)
    elif gather in ("onehot", "dma"):
        use_dma = gather == "dma"
    else:
        raise ValueError(f"unknown gather mode: {gather!r}")

    needed = dma_bytes if use_dma else onehot_bytes
    vmem_limit = int(min(max(needed + (8 << 20), 32 << 20), vmem_ceiling))
    compiler_params = pltpu.CompilerParams(
        dimension_semantics=("parallel", "parallel"),
        vmem_limit_bytes=vmem_limit)

    out_shape = jax.ShapeDtypeStruct((rows, cols_pad, D), out_dtype)

    if use_dma:
        # -------- large vocab: HBM table + SMEM ids + windowed per-row DMA gather ------ #
        ids_flat = ids2.reshape(-1)
        kernel = functools.partial(_dma_gather_kernel, scale=scale, ts=ts,
                                   row_len=cols_pad, nq=int(dma_window))
        grid_spec = pltpu.PrefetchScalarGridSpec(
            num_scalar_prefetch=1,
            grid=grid,
            in_specs=[
                pl.BlockSpec(memory_space=pl.ANY),                        # emb table (HBM)
                pl.BlockSpec((ts, D), lambda s, b, ids: (s, 0)),          # PE tile
            ],
            out_specs=pl.BlockSpec((1, ts, D), lambda s, b, ids: (b, s, 0)),
            scratch_shapes=[pltpu.VMEM((ts, D), emb_table.dtype),
                            pltpu.SemaphoreType.DMA((int(dma_window),))],
        )
        out = pl.pallas_call(kernel, out_shape=out_shape, grid_spec=grid_spec,
                             compiler_params=compiler_params)(ids_flat, emb_table, pe2)
    else:
        # -------- small vocab: VMEM-resident bf16 table, chunked one-hot MXU gather ---- #
        emb_bf16 = emb_table.astype(jnp.bfloat16)
        if v_pad != V:
            emb_bf16 = jnp.pad(emb_bf16, ((0, v_pad - V), (0, 0)))
        ids3 = ids2[:, :, None]                                   # ids on sublanes
        kernel = functools.partial(_onehot_kernel, scale=scale,
                                   n_chunks=v_pad // vc, vocab_chunk=vc)

        def call(single_buffer_table):
            table_kwargs = ({"pipeline_mode": pl.Buffered(1)}
                            if single_buffer_table else {})
            grid_spec = pltpu.PrefetchScalarGridSpec(
                num_scalar_prefetch=0,
                grid=grid,
                in_specs=[
                    pl.BlockSpec((1, ts, 1), lambda s, b: (b, s, 0)),        # ids tile
                    pl.BlockSpec((v_pad, D), lambda s, b: (0, 0), **table_kwargs),
                    pl.BlockSpec((ts, D), lambda s, b: (s, 0)),              # PE tile
                ],
                out_specs=pl.BlockSpec((1, ts, D), lambda s, b: (b, s, 0)),
                scratch_shapes=[pltpu.VMEM((ts, D), jnp.float32)],
            )
            return pl.pallas_call(kernel, out_shape=out_shape, grid_spec=grid_spec,
                                  compiler_params=compiler_params)(ids3, emb_bf16, pe2)

        try:
            out = call(True)       # constant-index table block: 1 buffer (half the VMEM)
        except Exception:
            out = call(False)      # fallback if this JAX build rejects Buffered(1)

    # ---- undo padding / flattening ---------------------------------------------------- #
    if flatten:
        out = out[0, :B * s_pad8].reshape(B, s_pad8, D)[:, :S]
    else:
        out = out[:, :S]
    return out


def make_sinusoidal_pe(max_len, d_model):
    """Exactly mirrors SinusoidalPositionalEncoding's buffer construction."""
    position = jnp.arange(max_len, dtype=jnp.float32)[:, None]
    div_term = jnp.exp(
        jnp.arange(0, d_model, 2, dtype=jnp.float32) * (-math.log(10000.0) / d_model)
    )
    pe = jnp.zeros((max_len, d_model), dtype=jnp.float32)
    pe = pe.at[:, 0::2].set(jnp.sin(position * div_term))
    pe = pe.at[:, 1::2].set(jnp.cos(position * div_term))
    return pe


if __name__ == "__main__":
    key = jax.random.PRNGKey(0)
    k_emb1, k_ids1, k_emb2, k_ids2, k_emb3, k_ids3 = jax.random.split(key, 6)

    # ---- config 1: tiny vocab -> bf16 one-hot MXU path (flattened short sequence) ---- #
    B1, S1, V1, D1, L1 = 2, 12, 512, 128, 64
    emb1 = jax.random.normal(k_emb1, (V1, D1), dtype=jnp.float32) * 0.02
    pe_tab1 = make_sinusoidal_pe(L1, D1)
    ids1 = jax.random.randint(k_ids1, (B1, S1), 0, V1, dtype=jnp.int32)

    out1 = jax.block_until_ready(transformer_embedding(ids1, emb1, pe_tab1))
    ref1 = emb1[ids1] * math.sqrt(D1) + pe_tab1[None, :S1, :]
    assert out1.shape == (B1, S1, D1) and out1.dtype == jnp.float32
    # bf16 table in the one-hot path -> values are bf16-rounded embeddings.
    assert jnp.allclose(out1, ref1, atol=5e-3, rtol=1e-2), float(jnp.abs(out1 - ref1).max())

    # ---- config 2: larger vocab -> HBM table + windowed DMA row gather (exact) ------- #
    B2, S2, V2, D2, L2 = 2, 300, 4096, 128, 512
    emb2 = jax.random.normal(k_emb2, (V2, D2), dtype=jnp.float32) * 0.02
    pe_tab2 = make_sinusoidal_pe(L2, D2)
    ids2 = jax.random.randint(k_ids2, (B2, S2), 0, V2, dtype=jnp.int32)

    out2 = jax.block_until_ready(transformer_embedding(ids2, emb2, pe_tab2))
    ref2 = emb2[ids2] * math.sqrt(D2) + pe_tab2[None, :S2, :]
    assert out2.shape == (B2, S2, D2)
    assert jnp.allclose(out2, ref2, atol=1e-5, rtol=1e-5), float(jnp.abs(out2 - ref2).max())

    # ---- config 3: mid vocab -> multi-chunk one-hot path (exercises the vocab loop) --- #
    B3, S3, V3, D3, L3 = 1, 40, 1280, 256, 64
    emb3 = jax.random.normal(k_emb3, (V3, D3), dtype=jnp.float32) * 0.02
    pe_tab3 = make_sinusoidal_pe(L3, D3)
    ids3 = jax.random.randint(k_ids3, (B3, S3), 0, V3, dtype=jnp.int32)

    out3 = jax.block_until_ready(transformer_embedding(ids3, emb3, pe_tab3))
    ref3 = emb3[ids3] * math.sqrt(D3) + pe_tab3[None, :S3, :]
    assert out3.shape == (B3, S3, D3)
    assert jnp.allclose(out3, ref3, atol=5e-3, rtol=1e-2), float(jnp.abs(out3 - ref3).max())

    # ---- bf16 output variant (halves the dominant HBM writeback) --------------------- #
    out1_bf16 = jax.block_until_ready(
        transformer_embedding(ids1, emb1, pe_tab1, out_dtype=jnp.bfloat16))
    assert out1_bf16.dtype == jnp.bfloat16
    assert jnp.allclose(out1_bf16.astype(jnp.float32), ref1, atol=5e-2, rtol=5e-2)

    print("KERNEL_OK")
</pallas_src>

<mosaic_0001>
module attributes {stable_mosaic.version = 11 : i64} {
  func.func @_onehot_kernel(%arg0: i32, %arg1: i32, %arg2: memref<1x32x1xi32, #tpu.memory_space<vmem>>, %arg3: memref<512x128xbf16, #tpu.memory_space<vmem>>, %arg4: memref<32x128xf32, #tpu.memory_space<vmem>>, %arg5: memref<1x32x128xf32, #tpu.memory_space<vmem>>, %arg6: memref<32x128xf32, #tpu.memory_space<vmem>>) attributes {dimension_semantics = [#tpu.dimension_semantics<parallel>, #tpu.dimension_semantics<parallel>], iteration_bounds = array<i64: 1, 1>, scalar_prefetch = 0 : i64, scratch_operands = 1 : i64, tpu.core_type = #tpu.core_type<tc>, window_params = [{transform_indices = @transform_0, window_bounds = array<i64: 1, 32, 1>}, {pipeline_mode = #tpu.pipeline_mode<synchronous>, transform_indices = @transform_1, window_bounds = array<i64: 512, 128>}, {transform_indices = @transform_2, window_bounds = array<i64: 32, 128>}, {transform_indices = @transform_3, window_bounds = array<i64: 1, 32, 128>}]} {
    %c0 = arith.constant 0 : index
    %c0_0 = arith.constant 0 : index
    %c0_1 = arith.constant 0 : index
    %0 = vector.load %arg2[%c0, %c0_0, %c0_1] : memref<1x32x1xi32, #tpu.memory_space<vmem>>, vector<1x32x1xi32>
    %1 = vector.shape_cast %0 : vector<1x32x1xi32> to vector<32x1xi32>
    %cst = arith.constant 0.000000e+00 : f32
    %2 = vector.broadcast %cst : f32 to vector<32x128xf32>
    %c0_2 = arith.constant 0 : index
    %c0_3 = arith.constant 0 : index
    %3 = vector.load %arg6[%c0_2, %c0_3] : memref<32x128xf32, #tpu.memory_space<vmem>>, vector<32x128xf32>
    tpu.vector_store %arg6[%c0_2, %c0_3], %2 {strides = array<i32>} : memref<32x128xf32, #tpu.memory_space<vmem>>, vector<32x128xf32>,
    %4 = tpu.iota {dimensions = array<i32: 1>} : vector<32x512xi32>
    %c0_i32 = arith.constant 0 : i32
    %5 = vector.broadcast %c0_i32 : i32 to vector<32x512xi32>
    %6 = arith.addi %4, %5 : vector<32x512xi32>
    %7 = vector.broadcast %1 : vector<32x1xi32> to vector<32x512xi32>
    %8 = arith.cmpi eq, %6, %7 : vector<32x512xi32>
    %9 = arith.extui %8 : vector<32x512xi1> to vector<32x512xi32>
    %10 = arith.sitofp %9 : vector<32x512xi32> to vector<32x512xf32>
    %11 = arith.truncf %10 : vector<32x512xf32> to vector<32x512xbf16>
    %c0_4 = arith.constant 0 : index
    %c0_5 = arith.constant 0 : index
    %12 = vector.load %arg6[%c0_4, %c0_5] : memref<32x128xf32, #tpu.memory_space<vmem>>, vector<32x128xf32>
    %c0_6 = arith.constant 0 : index
    %c0_7 = arith.constant 0 : index
    %13 = vector.load %arg3[%c0_6, %c0_7] : memref<512x128xbf16, #tpu.memory_space<vmem>>, vector<512x128xbf16>
    %cst_8 = arith.constant dense<0.000000e+00> : vector<32x128xf32>
    %14 = tpu.matmul %11, %13, %cst_8 {dimension_numbers = #tpu.dot_dimension_numbers<[1], [0], [0], [1], [0, 0, 1, 1], [], []>} : vector<32x512xbf16>, vector<512x128xbf16>, vector<32x128xf32> -> vector<32x128xf32>
    %15 = arith.addf %12, %14 : vector<32x128xf32>
    %c0_9 = arith.constant 0 : index
    %c0_10 = arith.constant 0 : index
    %16 = vector.load %arg6[%c0_9, %c0_10] : memref<32x128xf32, #tpu.memory_space<vmem>>, vector<32x128xf32>
    tpu.vector_store %arg6[%c0_9, %c0_10], %15 {strides = array<i32>} : memref<32x128xf32, #tpu.memory_space<vmem>>, vector<32x128xf32>,
    %c0_11 = arith.constant 0 : index
    %c0_12 = arith.constant 0 : index
    %17 = vector.load %arg6[%c0_11, %c0_12] : memref<32x128xf32, #tpu.memory_space<vmem>>, vector<32x128xf32>
    %cst_13 = arith.constant 11.3137083 : f32
    %18 = vector.broadcast %cst_13 : f32 to vector<32x128xf32>
    %19 = arith.mulf %17, %18 : vector<32x128xf32>
    %c0_14 = arith.constant 0 : index
    %c0_15 = arith.constant 0 : index
    %20 = vector.load %arg4[%c0_14, %c0_15] : memref<32x128xf32, #tpu.memory_space<vmem>>, vector<32x128xf32>
    %21 = arith.addf %19, %20 : vector<32x128xf32>
    %c0_16 = arith.constant 0 : index
    %c0_17 = arith.constant 0 : index
    %c0_18 = arith.constant 0 : index
    %22 = vector.load %arg5[%c0_16, %c0_17, %c0_18] : memref<1x32x128xf32, #tpu.memory_space<vmem>>, vector<1x32x128xf32>
    %23 = vector.shape_cast %22 : vector<1x32x128xf32> to vector<32x128xf32>
    %24 = vector.shape_cast %21 : vector<32x128xf32> to vector<1x32x128xf32>
    tpu.vector_store %arg5[%c0_16, %c0_17, %c0_18], %24 {strides = array<i32>} : memref<1x32x128xf32, #tpu.memory_space<vmem>>, vector<1x32x128xf32>,
    return
  }
  func.func @transform_0(%arg0: i32, %arg1: i32) -> (i32, i32, i32) {
    %c0_i32 = arith.constant 0 : i32
    %c0_i32_0 = arith.constant 0 : i32
    return %arg1, %arg0, %c0_i32 : i32, i32, i32
  }
  func.func @transform_1(%arg0: i32, %arg1: i32) -> (i32, i32) {
    %c0_i32 = arith.constant 0 : i32
    %c0_i32_0 = arith.constant 0 : i32
    %c0_i32_1 = arith.constant 0 : i32
    return %c0_i32, %c0_i32_0 : i32, i32
  }
  func.func @transform_2(%arg0: i32, %arg1: i32) -> (i32, i32) {
    %c0_i32 = arith.constant 0 : i32
    %c0_i32_0 = arith.constant 0 : i32
    return %arg0, %c0_i32 : i32, i32
  }
  func.func @transform_3(%arg0: i32, %arg1: i32) -> (i32, i32, i32) {
    %c0_i32 = arith.constant 0 : i32
    %c0_i32_0 = arith.constant 0 : i32
    return %arg1, %arg0, %c0_i32 : i32, i32, i32
  }
}

module attributes {stable_mosaic.version = 11 : i64} {
  func.func @_onehot_kernel(%arg0: i32, %arg1: i32, %arg2: memref<1x32x1xi32, #tpu.memory_space<vmem>>, %arg3: memref<512x128xbf16, #tpu.memory_space<vmem>>, %arg4: memref<32x128xf32, #tpu.memory_space<vmem>>, %arg5: memref<1x32x128xf32, #tpu.memory_space<vmem>>, %arg6: memref<32x128xf32, #tpu.memory_space<vmem>>) attributes {dimension_semantics = [#tpu.dimension_semantics<parallel>, #tpu.dimension_semantics<parallel>], iteration_bounds = array<i64: 1, 1>, scalar_prefetch = 0 : i64, scratch_operands = 1 : i64, tpu.core_type = #tpu.core_type<tc>, window_params = [{transform_indices = @transform_0, window_bounds = array<i64: 1, 32, 1>}, {pipeline_mode = #tpu.pipeline_mode<synchronous>, transform_indices = @transform_1, window_bounds = array<i64: 512, 128>}, {transform_indices = @transform_2, window_bounds = array<i64: 32, 128>}, {transform_indices = @transform_3, window_bounds = array<i64: 1, 32, 128>}]} {
    %c0 = arith.constant 0 : index
    %c0_0 = arith.constant 0 : index
    %c0_1 = arith.constant 0 : index
    %0 = vector.load %arg2[%c0, %c0_0, %c0_1] : memref<1x32x1xi32, #tpu.memory_space<vmem>>, vector<1x32x1xi32>
    %1 = vector.shape_cast %0 : vector<1x32x1xi32> to vector<32x1xi32>
    %cst = arith.constant 0.000000e+00 : f32
    %2 = vector.broadcast %cst : f32 to vector<32x128xf32>
    %c0_2 = arith.constant 0 : index
    %c0_3 = arith.constant 0 : index
    %3 = vector.load %arg6[%c0_2, %c0_3] : memref<32x128xf32, #tpu.memory_space<vmem>>, vector<32x128xf32>
    tpu.vector_store %arg6[%c0_2, %c0_3], %2 {strides = array<i32>} : memref<32x128xf32, #tpu.memory_space<vmem>>, vector<32x128xf32>,
    %4 = tpu.iota {dimensions = array<i32: 1>} : vector<32x512xi32>
    %c0_i32 = arith.constant 0 : i32
    %5 = vector.broadcast %c0_i32 : i32 to vector<32x512xi32>
    %6 = arith.addi %4, %5 : vector<32x512xi32>
    %7 = vector.broadcast %1 : vector<32x1xi32> to vector<32x512xi32>
    %8 = arith.cmpi eq, %6, %7 : vector<32x512xi32>
    %9 = arith.extui %8 : vector<32x512xi1> to vector<32x512xi32>
    %10 = arith.sitofp %9 : vector<32x512xi32> to vector<32x512xf32>
    %11 = arith.truncf %10 : vector<32x512xf32> to vector<32x512xbf16>
    %c0_4 = arith.constant 0 : index
    %c0_5 = arith.constant 0 : index
    %12 = vector.load %arg6[%c0_4, %c0_5] : memref<32x128xf32, #tpu.memory_space<vmem>>, vector<32x128xf32>
    %c0_6 = arith.constant 0 : index
    %c0_7 = arith.constant 0 : index
    %13 = vector.load %arg3[%c0_6, %c0_7] : memref<512x128xbf16, #tpu.memory_space<vmem>>, vector<512x128xbf16>
    %cst_8 = arith.constant dense<0.000000e+00> : vector<32x128xf32>
    %14 = tpu.matmul %11, %13, %cst_8 {dimension_numbers = #tpu.dot_dimension_numbers<[1], [0], [0], [1], [0, 0, 1, 1], [], []>} : vector<32x512xbf16>, vector<512x128xbf16>, vector<32x128xf32> -> vector<32x128xf32>
    %15 = arith.addf %12, %14 : vector<32x128xf32>
    %c0_9 = arith.constant 0 : index
    %c0_10 = arith.constant 0 : index
    %16 = vector.load %arg6[%c0_9, %c0_10] : memref<32x128xf32, #tpu.memory_space<vmem>>, vector<32x128xf32>
    tpu.vector_store %arg6[%c0_9, %c0_10], %15 {strides = array<i32>} : memref<32x128xf32, #tpu.memory_space<vmem>>, vector<32x128xf32>,
    %c0_11 = arith.constant 0 : index
    %c0_12 = arith.constant 0 : index
    %17 = vector.load %arg6[%c0_11, %c0_12] : memref<32x128xf32, #tpu.memory_space<vmem>>, vector<32x128xf32>
    %cst_13 = arith.constant 11.3137083 : f32
    %18 = vector.broadcast %cst_13 : f32 to vector<32x128xf32>
    %19 = arith.mulf %17, %18 : vector<32x128xf32>
    %c0_14 = arith.constant 0 : index
    %c0_15 = arith.constant 0 : index
    %20 = vector.load %arg4[%c0_14, %c0_15] : memref<32x128xf32, #tpu.memory_space<vmem>>, vector<32x128xf32>
    %21 = arith.addf %19, %20 : vector<32x128xf32>
    %c0_16 = arith.constant 0 : index
    %c0_17 = arith.constant 0 : index
    %c0_18 = arith.constant 0 : index
    %22 = vector.load %arg5[%c0_16, %c0_17, %c0_18] : memref<1x32x128xf32, #tpu.memory_space<vmem>>, vector<1x32x128xf32>
    %23 = vector.shape_cast %22 : vector<1x32x128xf32> to vector<32x128xf32>
    %24 = vector.shape_cast %21 : vector<32x128xf32> to vector<1x32x128xf32>
    tpu.vector_store %arg5[%c0_16, %c0_17, %c0_18], %24 {strides = array<i32>} : memref<1x32x128xf32, #tpu.memory_space<vmem>>, vector<1x32x128xf32>,
    return
  }
  func.func @transform_0(%arg0: i32, %arg1: i32) -> (i32, i32, i32) {
    %c0_i32 = arith.constant 0 : i32
    %c0_i32_0 = arith.constant 0 : i32
    return %arg1, %arg0, %c0_i32 : i32, i32, i32
  }
  func.func @transform_1(%arg0: i32, %arg1: i32) -> (i32, i32) {
    %c0_i32 = arith.constant 0 : i32
    %c0_i32_0 = arith.constant 0 : i32
    %c0_i32_1 = arith.constant 0 : i32
    return %c0_i32, %c0_i32_0 : i32, i32
  }
  func.func @transform_2(%arg0: i32, %arg1: i32) -> (i32, i32) {
    %c0_i32 = arith.constant 0 : i32
    %c0_i32_0 = arith.constant 0 : i32
    return %arg0, %c0_i32 : i32, i32
  }
  func.func @transform_3(%arg0: i32, %arg1: i32) -> (i32, i32, i32) {
    %c0_i32 = arith.constant 0 : i32
    %c0_i32_0 = arith.constant 0 : i32
    return %arg1, %arg0, %c0_i32 : i32, i32, i32
  }
}

</mosaic_0001>

<llo_original>
// kernel: tpu_custom_call.1
$region0: #{tpu_custom_call.1}
  #allocation0 [shape = 'u32[]', space=smem, size = 0x4, offset = 0x4, fixed_abs, tag = 'smem constant byte address 0x4 - core index']
  #allocation1 [shape = 'u32[144,128]{1,0:T(1,128)}', space=vmem, size = 0x12000, scoped, tag = 'internal scratch']
  #allocation2 [shape = 'f32[32,128]{1,0:T(8,128)}', space=vmem, size = 0x4000, scoped, tag = 'scratch operand']
  %s0 = inlined_call_operand.vmem [shape: s32[1,32,1], index: 0, kind: input, shape index: {}]
  %s1 = inlined_call_operand.hbm [shape: bf16[512,128], index: 1, kind: input, shape index: {}]
  %s2 = inlined_call_operand.vmem [shape: f32[32,128], index: 2, kind: input, shape index: {}]
  %s3 = inlined_call_operand.hbm [shape: f32[1,32,128], index: 3, kind: output, shape index: {}]
  %s4 = sld [smem:[#allocation0]]
  $region26: #{tpu_custom_call.1} parent=0
    _
  %s6 = ssub.s32 1, %s4
  %s7 = scalar_select 0, %s6, %s4
  $region1: #{tpu_custom_call.1} parent=0
    #allocation3 [shape = 'u8[131072]{0}', space=vmem, size = 0x20000, scoped, tag = 'input window, operand 1, single buffered']
    #allocation4 [shape = 's32[1]{0}', space=sflag, size = 0x4, scoped, tag = 'scoped memory for tpu_custom_call.1']
    #allocation5 [shape = 's32[1]{0}', space=sflag, size = 0x4, scoped, tag = 'scoped memory for tpu_custom_call.1']
    #allocation6 [shape = 'u8[16384]{0}', space=vmem, size = 0x4000, scoped, tag = 'output window, operand 0, single buffered']
    %8 = vsyncpa [#allocation4], 0
    %9 = vsyncpa [#allocation5], 0
    // Predicated region
    $region2: #{tpu_custom_call.1} parent=1 // pred_check
      _
    $region3: #{tpu_custom_call.1} parent=1 // pred_check_branch
      %11 = sbr.rel (0) target = $region5
    $region4: #{tpu_custom_call.1} parent=1 // pred_region
      _
    $region5: #{tpu_custom_call.1} parent=1 // pred_fallthru
      _
    // Predicated region
    $region6: #{tpu_custom_call.1} parent=1 // pred_check
      _
    $region7: #{tpu_custom_call.1} parent=1 // pred_check_branch
      %13 = sbr.rel (0) target = $region9
    $region8: #{tpu_custom_call.1} parent=1 // pred_region
      %s15 = ssub.s32 4096, 4096
      %16 = vsyncadd [#allocation4], %s15
      %s17 = sshll.u32 [#allocation3], 4
      %s18 = int_to_ptr.vmem [resolvable:$true] %s17
      %23 = dma.hbm_to_vmem [thread:$0]  %s1, 4096, %s18, [#allocation4], 64, 64, 4
    $region9: #{tpu_custom_call.1} parent=1 // pred_fallthru
      _
    // Predicated region
    $region10: #{tpu_custom_call.1} parent=1 // pred_check
      _
    $region11: #{tpu_custom_call.1} parent=1 // pred_check_branch
      %25 = sbr.rel (0) target = $region13
    $region12: #{tpu_custom_call.1} parent=1 // pred_region
      _
    $region13: #{tpu_custom_call.1} parent=1 // pred_fallthru
      _
    // Predicated region
    $region14: #{tpu_custom_call.1} parent=1 // pred_check
      _
    $region15: #{tpu_custom_call.1} parent=1 // pred_check_branch
      %27 = sbr.rel (0) target = $region17
    $region16: #{tpu_custom_call.1} parent=1 // pred_region
      %28 = dma.done [#allocation4], 4096
    $region17: #{tpu_custom_call.1} parent=1 // pred_fallthru
      _
    %v30 = vld [vmem:[%s0] sm:$0xff]
    %v31 = vld [vmem:[%s0 + $0x8] sm:$0xff]
    %v32 = vld [vmem:[%s0 + $0x10] sm:$0xff]
    %v33 = vld [vmem:[%s0 + $0x18] sm:$0xff]
    %34 = vst [vmem:[#allocation2] sm:$0xff] 0.0
    %35 = vst [vmem:[#allocation2 + $0x8] sm:$0xff] 0.0
    %36 = vst [vmem:[#allocation2 + $0x10] sm:$0xff] 0.0
    %37 = vst [vmem:[#allocation2 + $0x18] sm:$0xff] 0.0
    %v38 = vlaneseq
    %v39 = vand.u32 %v38, 127
    %v40 = vadd.s32 %v39, 128
    %v41 = vadd.s32 %v39, 256
    %v42 = vadd.s32 %v39, 384
    %43 = vset.pattern.permute.xlu0 0
    %44 = vperm.xlu0 %43, %v30
    %v45 = vpop.permute.xlu0 %44
    %46 = vset.pattern.permute.xlu0 0
    %47 = vperm.xlu0 %46, %v31
    %v48 = vpop.permute.xlu0 %47
    %49 = vset.pattern.permute.xlu0 0
    %50 = vperm.xlu0 %49, %v32
    %v51 = vpop.permute.xlu0 %50
    %52 = vset.pattern.permute.xlu0 0
    %53 = vperm.xlu0 %52, %v33
    %v54 = vpop.permute.xlu0 %53
    %vm55 = vcmp.eq.s32.totalorder %v39, %v45
    %vm56 = vcmp.eq.s32.totalorder %v40, %v45
    %vm57 = vcmp.eq.s32.totalorder %v41, %v45
    %vm58 = vcmp.eq.s32.totalorder %v42, %v45
    %vm59 = vcmp.eq.s32.totalorder %v39, %v48
    %vm60 = vcmp.eq.s32.totalorder %v40, %v48
    %vm61 = vcmp.eq.s32.totalorder %v41, %v48
    %vm62 = vcmp.eq.s32.totalorder %v42, %v48
    %vm63 = vcmp.eq.s32.totalorder %v39, %v51
    %vm64 = vcmp.eq.s32.totalorder %v40, %v51
    %vm65 = vcmp.eq.s32.totalorder %v41, %v51
    %vm66 = vcmp.eq.s32.totalorder %v42, %v51
    %vm67 = vcmp.eq.s32.totalorder %v39, %v54
    %vm68 = vcmp.eq.s32.totalorder %v40, %v54
    %vm69 = vcmp.eq.s32.totalorder %v41, %v54
    %vm70 = vcmp.eq.s32.totalorder %v42, %v54
    %v71 = vsel %vm55, 1, 0
    %v72 = vsel %vm56, 1, 0
    %v73 = vsel %vm57, 1, 0
    %v74 = vsel %vm58, 1, 0
    %v75 = vsel %vm59, 1, 0
    %v76 = vsel %vm60, 1, 0
    %v77 = vsel %vm61, 1, 0
    %v78 = vsel %vm62, 1, 0
    %v79 = vsel %vm63, 1, 0
    %v80 = vsel %vm64, 1, 0
    %v81 = vsel %vm65, 1, 0
    %v82 = vsel %vm66, 1, 0
    %v83 = vsel %vm67, 1, 0
    %v84 = vsel %vm68, 1, 0
    %v85 = vsel %vm69, 1, 0
    %v86 = vsel %vm70, 1, 0
    %v87 = vcvt.s32.f32 %v71
    %v88 = vcvt.s32.f32 %v72
    %v89 = vcvt.s32.f32 %v73
    %v90 = vcvt.s32.f32 %v74
    %v91 = vcvt.s32.f32 %v75
    %v92 = vcvt.s32.f32 %v76
    %v93 = vcvt.s32.f32 %v77
    %v94 = vcvt.s32.f32 %v78
    %v95 = vcvt.s32.f32 %v79
    %v96 = vcvt.s32.f32 %v80
    %v97 = vcvt.s32.f32 %v81
    %v98 = vcvt.s32.f32 %v82
    %v99 = vcvt.s32.f32 %v83
    %v100 = vcvt.s32.f32 %v84
    %v101 = vcvt.s32.f32 %v85
    %v102 = vcvt.s32.f32 %v86
    %v103 = vpack.c.bf16 %v91, %v87
    %v104 = vpack.c.bf16 %v92, %v88
    %v105 = vpack.c.bf16 %v93, %v89
    %v106 = vpack.c.bf16 %v94, %v90
    %v107 = vpack.c.bf16 %v99, %v95
    %v108 = vpack.c.bf16 %v100, %v96
    %v109 = vpack.c.bf16 %v101, %v97
    %v110 = vpack.c.bf16 %v102, %v98
    %v111 = vld [vmem:[#allocation2] sm:$0xff]
    %v112 = vld [vmem:[#allocation2 + $0x8] sm:$0xff]
    %v113 = vld [vmem:[#allocation2 + $0x10] sm:$0xff]
    %v114 = vld [vmem:[#allocation2 + $0x18] sm:$0xff]
    %v115 = vld [vmem:[#allocation3] sm:$0xf]
    %v116 = vld [vmem:[#allocation3 + $0x4] sm:$0xf]
    %v117 = vld [vmem:[#allocation3 + $0x8] sm:$0xf]
    %v118 = vld [vmem:[#allocation3 + $0xc] sm:$0xf]
    %v119 = vld [vmem:[#allocation3 + $0x10] sm:$0xf]
    %v120 = vld [vmem:[#allocation3 + $0x14] sm:$0xf]
    %v121 = vld [vmem:[#allocation3 + $0x18] sm:$0xf]
    %v122 = vld [vmem:[#allocation3 + $0x1c] sm:$0xf]
    %v123 = vld [vmem:[#allocation3 + $0x20] sm:$0xf]
    %v124 = vld [vmem:[#allocation3 + $0x24] sm:$0xf]
    %v125 = vld [vmem:[#allocation3 + $0x28] sm:$0xf]
    %v126 = vld [vmem:[#allocation3 + $0x2c] sm:$0xf]
    %v127 = vld [vmem:[#allocation3 + $0x30] sm:$0xf]
    %v128 = vld [vmem:[#allocation3 + $0x34] sm:$0xf]
    %v129 = vld [vmem:[#allocation3 + $0x38] sm:$0xf]
    %v130 = vld [vmem:[#allocation3 + $0x3c] sm:$0xf]
    %v131 = vld [vmem:[#allocation3 + $0x40] sm:$0xf]
    %v132 = vld [vmem:[#allocation3 + $0x44] sm:$0xf]
    %v133 = vld [vmem:[#allocation3 + $0x48] sm:$0xf]
    %v134 = vld [vmem:[#allocation3 + $0x4c] sm:$0xf]
    %v135 = vld [vmem:[#allocation3 + $0x50] sm:$0xf]
    %v136 = vld [vmem:[#allocation3 + $0x54] sm:$0xf]
    %v137 = vld [vmem:[#allocation3 + $0x58] sm:$0xf]
    %v138 = vld [vmem:[#allocation3 + $0x5c] sm:$0xf]
    %v139 = vld [vmem:[#allocation3 + $0x60] sm:$0xf]
    %v140 = vld [vmem:[#allocation3 + $0x64] sm:$0xf]
    %v141 = vld [vmem:[#allocation3 + $0x68] sm:$0xf]
    %v142 = vld [vmem:[#allocation3 + $0x6c] sm:$0xf]
    %v143 = vld [vmem:[#allocation3 + $0x70] sm:$0xf]
    %v144 = vld [vmem:[#allocation3 + $0x74] sm:$0xf]
    %v145 = vld [vmem:[#allocation3 + $0x78] sm:$0xf]
    %v146 = vld [vmem:[#allocation3 + $0x7c] sm:$0xf]
    %v147 = vld [vmem:[#allocation3 + $0x80] sm:$0xf]
    %v148 = vld [vmem:[#allocation3 + $0x84] sm:$0xf]
    %v149 = vld [vmem:[#allocation3 + $0x88] sm:$0xf]
    %v150 = vld [vmem:[#allocation3 + $0x8c] sm:$0xf]
    %v151 = vld [vmem:[#allocation3 + $0x90] sm:$0xf]
    %v152 = vld [vmem:[#allocation3 + $0x94] sm:$0xf]
    %v153 = vld [vmem:[#allocation3 + $0x98] sm:$0xf]
    %v154 = vld [vmem:[#allocation3 + $0x9c] sm:$0xf]
    %v155 = vld [vmem:[#allocation3 + $0xa0] sm:$0xf]
    %v156 = vld [vmem:[#allocation3 + $0xa4] sm:$0xf]
    %v157 = vld [vmem:[#allocation3 + $0xa8] sm:$0xf]
    %v158 = vld [vmem:[#allocation3 + $0xac] sm:$0xf]
    %v159 = vld [vmem:[#allocation3 + $0xb0] sm:$0xf]
    %v160 = vld [vmem:[#allocation3 + $0xb4] sm:$0xf]
    %v161 = vld [vmem:[#allocation3 + $0xb8] sm:$0xf]
    %v162 = vld [vmem:[#allocation3 + $0xbc] sm:$0xf]
    %v163 = vld [vmem:[#allocation3 + $0xc0] sm:$0xf]
    %v164 = vld [vmem:[#allocation3 + $0xc4] sm:$0xf]
    %v165 = vld [vmem:[#allocation3 + $0xc8] sm:$0xf]
    %v166 = vld [vmem:[#allocation3 + $0xcc] sm:$0xf]
    %v167 = vld [vmem:[#allocation3 + $0xd0] sm:$0xf]
    %v168 = vld [vmem:[#allocation3 + $0xd4] sm:$0xf]
    %v169 = vld [vmem:[#allocation3 + $0xd8] sm:$0xf]
    %v170 = vld [vmem:[#allocation3 + $0xdc] sm:$0xf]
    %v171 = vld [vmem:[#allocation3 + $0xe0] sm:$0xf]
    %v172 = vld [vmem:[#allocation3 + $0xe4] sm:$0xf]
    %v173 = vld [vmem:[#allocation3 + $0xe8] sm:$0xf]
    %v174 = vld [vmem:[#allocation3 + $0xec] sm:$0xf]
    %v175 = vld [vmem:[#allocation3 + $0xf0] sm:$0xf]
    %v176 = vld [vmem:[#allocation3 + $0xf4] sm:$0xf]
    %v177 = vld [vmem:[#allocation3 + $0xf8] sm:$0xf]
    %v178 = vld [vmem:[#allocation3 + $0xfc] sm:$0xf]
    %v243 = vunpack.c.l.b16 %v115
    %v244 = vunpack.c.l.b16 %v116
    %v245 = vunpack.c.l.b16 %v117
    %v246 = vunpack.c.l.b16 %v118
    %v247 = vunpack.c.l.b16 %v119
    %v248 = vunpack.c.l.b16 %v120
    %v249 = vunpack.c.l.b16 %v121
    %v250 = vunpack.c.l.b16 %v122
    %v251 = vunpack.c.l.b16 %v123
    %v252 = vunpack.c.l.b16 %v124
    %v253 = vunpack.c.l.b16 %v125
    %v254 = vunpack.c.l.b16 %v126
    %v255 = vunpack.c.l.b16 %v127
    %v256 = vunpack.c.l.b16 %v128
    %v257 = vunpack.c.l.b16 %v129
    %v258 = vunpack.c.l.b16 %v130
    %v259 = vunpack.c.l.b16 %v131
    %v260 = vunpack.c.l.b16 %v132
    %v261 = vunpack.c.l.b16 %v133
    %v262 = vunpack.c.l.b16 %v134
    %v263 = vunpack.c.l.b16 %v135
    %v264 = vunpack.c.l.b16 %v136
    %v265 = vunpack.c.l.b16 %v137
    %v266 = vunpack.c.l.b16 %v138
    %v267 = vunpack.c.l.b16 %v139
    %v268 = vunpack.c.l.b16 %v140
    %v269 = vunpack.c.l.b16 %v141
    %v270 = vunpack.c.l.b16 %v142
    %v271 = vunpack.c.l.b16 %v143
    %v272 = vunpack.c.l.b16 %v144
    %v273 = vunpack.c.l.b16 %v145
    %v274 = vunpack.c.l.b16 %v146
    %v275 = vunpack.c.l.b16 %v147
    %v276 = vunpack.c.l.b16 %v148
    %v277 = vunpack.c.l.b16 %v149
    %v278 = vunpack.c.l.b16 %v150
    %v279 = vunpack.c.l.b16 %v151
    %v280 = vunpack.c.l.b16 %v152
    %v281 = vunpack.c.l.b16 %v153
    %v282 = vunpack.c.l.b16 %v154
    %v283 = vunpack.c.l.b16 %v155
    %v284 = vunpack.c.l.b16 %v156
    %v285 = vunpack.c.l.b16 %v157
    %v286 = vunpack.c.l.b16 %v158
    %v287 = vunpack.c.l.b16 %v159
    %v288 = vunpack.c.l.b16 %v160
    %v289 = vunpack.c.l.b16 %v161
    %v290 = vunpack.c.l.b16 %v162
    %v291 = vunpack.c.l.b16 %v163
    %v292 = vunpack.c.l.b16 %v164
    %v293 = vunpack.c.l.b16 %v165
    %v294 = vunpack.c.l.b16 %v166
    %v295 = vunpack.c.l.b16 %v167
    %v296 = vunpack.c.l.b16 %v168
    %v297 = vunpack.c.l.b16 %v169
    %v298 = vunpack.c.l.b16 %v170
    %v299 = vunpack.c.l.b16 %v171
    %v300 = vunpack.c.l.b16 %v172
    %v301 = vunpack.c.l.b16 %v173
    %v302 = vunpack.c.l.b16 %v174
    %v303 = vunpack.c.l.b16 %v175
    %v304 = vunpack.c.l.b16 %v176
    %v305 = vunpack.c.l.b16 %v177
    %v306 = vunpack.c.l.b16 %v178
    %v307 = vpack.c.b16 %v244, %v243
    %v308 = vpack.c.b16 %v246, %v245
    %v309 = vpack.c.b16 %v248, %v247
    %v310 = vpack.c.b16 %v250, %v249
    %v311 = vpack.c.b16 %v252, %v251
    %v312 = vpack.c.b16 %v254, %v253
    %v313 = vpack.c.b16 %v256, %v255
    %v314 = vpack.c.b16 %v258, %v257
    %v315 = vpack.c.b16 %v260, %v259
    %v316 = vpack.c.b16 %v262, %v261
    %v317 = vpack.c.b16 %v264, %v263
    %v318 = vpack.c.b16 %v266, %v265
    %v319 = vpack.c.b16 %v268, %v267
    %v320 = vpack.c.b16 %v270, %v269
    %v321 = vpack.c.b16 %v272, %v271
    %v322 = vpack.c.b16 %v274, %v273
    %v323 = vpack.c.b16 %v276, %v275
    %v324 = vpack.c.b16 %v278, %v277
    %v325 = vpack.c.b16 %v280, %v279
    %v326 = vpack.c.b16 %v282, %v281
    %v327 = vpack.c.b16 %v284, %v283
    %v328 = vpack.c.b16 %v286, %v285
    %v329 = vpack.c.b16 %v288, %v287
    %v330 = vpack.c.b16 %v290, %v289
    %v331 = vpack.c.b16 %v292, %v291
    %v332 = vpack.c.b16 %v294, %v293
    %v333 = vpack.c.b16 %v296, %v295
    %v334 = vpack.c.b16 %v298, %v297
    %v335 = vpack.c.b16 %v300, %v299
    %v336 = vpack.c.b16 %v302, %v301
    %v337 = vpack.c.b16 %v304, %v303
    %v338 = vpack.c.b16 %v306, %v305
    %371 = vmatprep.subr.bf16.mxu0 0
    %372 = vmatpush1.bf16.msra.mxu0 %v314
    %373 = vmatprep.subr.bf16.mxu0 0
    %374 = vmatpush1.bf16.msra.mxu0 %v313
    %375 = vmatprep.subr.bf16.mxu0 0
    %376 = vmatpush1.bf16.msra.mxu0 %v312
    %377 = vmatprep.subr.bf16.mxu0 0
    %378 = vmatpush1.bf16.msra.mxu0 %v311
    %379 = vmatprep.subr.bf16.mxu0 0
    %380 = vmatpush1.bf16.msra.mxu0 %v310
    %381 = vmatprep.subr.bf16.mxu0 0
    %382 = vmatpush1.bf16.msra.mxu0 %v309
    %383 = vmatprep.subr.bf16.mxu0 0
    %384 = vmatpush1.bf16.msra.mxu0 %v308
    %385 = vmatprep.subr.bf16.mxu0 0
    %386 = vmatpush1.bf16.msra.mxu0 %v307
    %387 = vmatprep.subr.bf16.mxu0 0
    %388 = vmatpush2.bf16.msra.mxu0 %v322
    %389 = vmatprep.subr.bf16.mxu0 0
    %390 = vmatpush2.bf16.msra.mxu0 %v321
    %391 = vmatprep.subr.bf16.mxu0 0
    %392 = vmatpush2.bf16.msra.mxu0 %v320
    %393 = vmatprep.subr.bf16.mxu0 0
    %394 = vmatpush2.bf16.msra.mxu0 %v319
    %395 = vmatprep.subr.bf16.mxu0 0
    %396 = vmatpush2.bf16.msra.mxu0 %v318
    %397 = vmatprep.subr.bf16.mxu0 0
    %398 = vmatpush2.bf16.msra.mxu0 %v317
    %399 = vmatprep.subr.bf16.mxu0 0
    %400 = vmatpush2.bf16.msra.mxu0 %v316
    %401 = vmatprep.subr.bf16.mxu0 0
    %402 = vmatpush2.bf16.msra.mxu0 %v315
    %403 = vmatprep.mubr.bf16.mxu0 %v104
    %404 = vmatmul.mubr.bf16.gmra.mxu0 %v103
    %v405 = vpop.f32.mrf.mxu0
    %v406 = vadd.f32 0.0, %v405
    %v407 = vpop.f32.mrf.mxu0
    %v408 = vpop.f32.mrf.mxu0
    %v409 = vadd.f32 0.0, %v408
    %v410 = vpop.f32.mrf.mxu0
    %411 = vmatprep.mubr.bf16.mxu0 %v108
    %412 = vmatmul.mubr.bf16.gmra.mxu0 %v107
    %v413 = vpop.f32.mrf.mxu0
    %v414 = vadd.f32 0.0, %v413
    %v415 = vpop.f32.mrf.mxu0
    %v416 = vpop.f32.mrf.mxu0
    %v417 = vadd.f32 0.0, %v416
    %v418 = vpop.f32.mrf.mxu0
    %419 = vdwg.mxu0
    %420 = vmatprep.subr.bf16.mxu0 0
    %421 = vmatpush1.bf16.msra.mxu0 %v330
    %422 = vmatprep.subr.bf16.mxu0 0
    %423 = vmatpush1.bf16.msra.mxu0 %v329
    %424 = vmatprep.subr.bf16.mxu0 0
    %425 = vmatpush1.bf16.msra.mxu0 %v328
    %426 = vmatprep.subr.bf16.mxu0 0
    %427 = vmatpush1.bf16.msra.mxu0 %v327
    %428 = vmatprep.subr.bf16.mxu0 0
    %429 = vmatpush1.bf16.msra.mxu0 %v326
    %430 = vmatprep.subr.bf16.mxu0 0
    %431 = vmatpush1.bf16.msra.mxu0 %v325
    %432 = vmatprep.subr.bf16.mxu0 0
    %433 = vmatpush1.bf16.msra.mxu0 %v324
    %434 = vmatprep.subr.bf16.mxu0 0
    %435 = vmatpush1.bf16.msra.mxu0 %v323
    %436 = vmatprep.subr.bf16.mxu0 0
    %437 = vmatpush2.bf16.msra.mxu0 %v338
    %438 = vmatprep.subr.bf16.mxu0 0
    %439 = vmatpush2.bf16.msra.mxu0 %v337
    %440 = vmatprep.subr.bf16.mxu0 0
    %441 = vmatpush2.bf16.msra.mxu0 %v336
    %442 = vmatprep.subr.bf16.mxu0 0
    %443 = vmatpush2.bf16.msra.mxu0 %v335
    %444 = vmatprep.subr.bf16.mxu0 0
    %445 = vmatpush2.bf16.msra.mxu0 %v334
    %446 = vmatprep.subr.bf16.mxu0 0
    %447 = vmatpush2.bf16.msra.mxu0 %v333
    %448 = vmatprep.subr.bf16.mxu0 0
    %449 = vmatpush2.bf16.msra.mxu0 %v332
    %450 = vmatprep.subr.bf16.mxu0 0
    %451 = vmatpush2.bf16.msra.mxu0 %v331
    %452 = vmatprep.mubr.bf16.mxu0 %v106
    %453 = vmatmul.mubr.bf16.gmra.mxu0 %v105
    %v454 = vpop.f32.mrf.mxu0
    %v455 = vadd.f32 %v406, %v454
    %v456 = vpop.f32.mrf.mxu0
    %v457 = vpop.f32.mrf.mxu0
    %v458 = vadd.f32 %v409, %v457
    %v459 = vpop.f32.mrf.mxu0
    %460 = vmatprep.mubr.bf16.mxu0 %v110
    %461 = vmatmul.mubr.bf16.gmra.mxu0 %v109
    %v462 = vpop.f32.mrf.mxu0
    %v463 = vadd.f32 %v414, %v462
    %v464 = vpop.f32.mrf.mxu0
    %v465 = vpop.f32.mrf.mxu0
    %v466 = vadd.f32 %v417, %v465
    %v467 = vpop.f32.mrf.mxu0
    %468 = vdwg.mxu0
    %v469 = vadd.f32 %v111, %v455
    %v470 = vadd.f32 %v112, %v458
    %v471 = vadd.f32 %v113, %v463
    %v472 = vadd.f32 %v114, %v466
    %473 = vst [vmem:[#allocation2] sm:$0xff] %v469
    %474 = vst [vmem:[#allocation2 + $0x8] sm:$0xff] %v470
    %475 = vst [vmem:[#allocation2 + $0x10] sm:$0xff] %v471
    %476 = vst [vmem:[#allocation2 + $0x18] sm:$0xff] %v472
    %v477 = vld [vmem:[#allocation2] sm:$0xff]
    %v478 = vld [vmem:[#allocation2 + $0x8] sm:$0xff]
    %v479 = vld [vmem:[#allocation2 + $0x10] sm:$0xff]
    %v480 = vld [vmem:[#allocation2 + $0x18] sm:$0xff]
    %v481 = vmul.f32 %v477, 11.313708
    %v482 = vmul.f32 %v478, 11.313708
    %v483 = vmul.f32 %v479, 11.313708
    %v484 = vmul.f32 %v480, 11.313708
    %v485 = vld [vmem:[%s2] sm:$0xff]
    %v486 = vld [vmem:[%s2 + $0x8] sm:$0xff]
    %v487 = vld [vmem:[%s2 + $0x10] sm:$0xff]
    %v488 = vld [vmem:[%s2 + $0x18] sm:$0xff]
    %v489 = vadd.f32 %v481, %v485
    %v490 = vadd.f32 %v482, %v486
    %v491 = vadd.f32 %v483, %v487
    %v492 = vadd.f32 %v484, %v488
    %493 = vst [vmem:[#allocation6] sm:$0xff] %v489
    %494 = vst [vmem:[#allocation6 + $0x8] sm:$0xff] %v490
    %495 = vst [vmem:[#allocation6 + $0x10] sm:$0xff] %v491
    %496 = vst [vmem:[#allocation6 + $0x18] sm:$0xff] %v492
    // Predicated region
    $region18: #{tpu_custom_call.1} parent=1 // pred_check
      _
    $region19: #{tpu_custom_call.1} parent=1 // pred_check_branch
      %498 = sbr.rel (0) target = $region21
    $region20: #{tpu_custom_call.1} parent=1 // pred_region
      %s500 = ssub.s32 512, 512
      %501 = vsyncadd [#allocation5], %s500
      %s502 = sshll.u32 [#allocation6], 4
      %s503 = int_to_ptr.vmem [resolvable:$true] %s502
      %508 = dma.vmem_to_hbm [thread:$0]  %s503, 512, %s3, [#allocation5], 128, 128, 8
    $region21: #{tpu_custom_call.1} parent=1 // pred_fallthru
      _
    // Predicated region
    $region22: #{tpu_custom_call.1} parent=1 // pred_check
      _
    $region23: #{tpu_custom_call.1} parent=1 // pred_check_branch
      %510 = sbr.rel (0) target = $region25
    $region24: #{tpu_custom_call.1} parent=1 // pred_region
      %511 = dma.done [#allocation5], 512
    $region25: #{tpu_custom_call.1} parent=1 // pred_fallthru
      _
    %512 = vsyncpa [#allocation4], 1
    %513 = vsyncpa [#allocation5], 1

// kernel: tpu_custom_call.1
$region0: #{tpu_custom_call.1}
  #allocation0 [shape = 'u32[]', space=smem, size = 0x4, offset = 0x4, fixed_abs, tag = 'smem constant byte address 0x4 - core index']
  #allocation1 [shape = 'u32[144,128]{1,0:T(1,128)}', space=vmem, size = 0x12000, scoped, tag = 'internal scratch']
  #allocation2 [shape = 'f32[32,128]{1,0:T(8,128)}', space=vmem, size = 0x4000, scoped, tag = 'scratch operand']
  %s0 = inlined_call_operand.vmem [shape: s32[1,32,1], index: 0, kind: input, shape index: {}]
  %s1 = inlined_call_operand.hbm [shape: bf16[512,128], index: 1, kind: input, shape index: {}]
  %s2 = inlined_call_operand.vmem [shape: f32[32,128], index: 2, kind: input, shape index: {}]
  %s3 = inlined_call_operand.hbm [shape: f32[1,32,128], index: 3, kind: output, shape index: {}]
  %s4 = sld [smem:[#allocation0]]
  $region26: #{tpu_custom_call.1} parent=0
    _
  %s6 = ssub.s32 1, %s4
  %s7 = scalar_select 0, %s6, %s4
  $region1: #{tpu_custom_call.1} parent=0
    #allocation3 [shape = 'u8[131072]{0}', space=vmem, size = 0x20000, scoped, tag = 'input window, operand 1, single buffered']
    #allocation4 [shape = 's32[1]{0}', space=sflag, size = 0x4, scoped, tag = 'scoped memory for tpu_custom_call.1']
    #allocation5 [shape = 's32[1]{0}', space=sflag, size = 0x4, scoped, tag = 'scoped memory for tpu_custom_call.1']
    #allocation6 [shape = 'u8[16384]{0}', space=vmem, size = 0x4000, scoped, tag = 'output window, operand 0, single buffered']
    %8 = vsyncpa [#allocation4], 0
    %9 = vsyncpa [#allocation5], 0
    // Predicated region
    $region2: #{tpu_custom_call.1} parent=1 // pred_check
      _
    $region3: #{tpu_custom_call.1} parent=1 // pred_check_branch
      %11 = sbr.rel (0) target = $region5
    $region4: #{tpu_custom_call.1} parent=1 // pred_region
      _
    $region5: #{tpu_custom_call.1} parent=1 // pred_fallthru
      _
    // Predicated region
    $region6: #{tpu_custom_call.1} parent=1 // pred_check
      _
    $region7: #{tpu_custom_call.1} parent=1 // pred_check_branch
      %13 = sbr.rel (0) target = $region9
    $region8: #{tpu_custom_call.1} parent=1 // pred_region
      %s15 = ssub.s32 4096, 4096
      %16 = vsyncadd [#allocation4], %s15
      %s17 = sshll.u32 [#allocation3], 4
      %s18 = int_to_ptr.vmem [resolvable:$true] %s17
      %23 = dma.hbm_to_vmem [thread:$0]  %s1, 4096, %s18, [#allocation4], 64, 64, 4
    $region9: #{tpu_custom_call.1} parent=1 // pred_fallthru
      _
    // Predicated region
    $region10: #{tpu_custom_call.1} parent=1 // pred_check
      _
    $region11: #{tpu_custom_call.1} parent=1 // pred_check_branch
      %25 = sbr.rel (0) target = $region13
    $region12: #{tpu_custom_call.1} parent=1 // pred_region
      _
    $region13: #{tpu_custom_call.1} parent=1 // pred_fallthru
      _
    // Predicated region
    $region14: #{tpu_custom_call.1} parent=1 // pred_check
      _
    $region15: #{tpu_custom_call.1} parent=1 // pred_check_branch
      %27 = sbr.rel (0) target = $region17
    $region16: #{tpu_custom_call.1} parent=1 // pred_region
      %28 = dma.done [#allocation4], 4096
    $region17: #{tpu_custom_call.1} parent=1 // pred_fallthru
      _
    %v30 = vld [vmem:[%s0] sm:$0xff]
    %v31 = vld [vmem:[%s0 + $0x8] sm:$0xff]
    %v32 = vld [vmem:[%s0 + $0x10] sm:$0xff]
    %v33 = vld [vmem:[%s0 + $0x18] sm:$0xff]
    %34 = vst [vmem:[#allocation2] sm:$0xff] 0.0
    %35 = vst [vmem:[#allocation2 + $0x8] sm:$0xff] 0.0
    %36 = vst [vmem:[#allocation2 + $0x10] sm:$0xff] 0.0
    %37 = vst [vmem:[#allocation2 + $0x18] sm:$0xff] 0.0
    %v38 = vlaneseq
    %v39 = vand.u32 %v38, 127
    %v40 = vadd.s32 %v39, 128
    %v41 = vadd.s32 %v39, 256
    %v42 = vadd.s32 %v39, 384
    %43 = vset.pattern.permute.xlu0 0
    %44 = vperm.xlu0 %43, %v30
    %v45 = vpop.permute.xlu0 %44
    %46 = vset.pattern.permute.xlu0 0
    %47 = vperm.xlu0 %46, %v31
    %v48 = vpop.permute.xlu0 %47
    %49 = vset.pattern.permute.xlu0 0
    %50 = vperm.xlu0 %49, %v32
    %v51 = vpop.permute.xlu0 %50
    %52 = vset.pattern.permute.xlu0 0
    %53 = vperm.xlu0 %52, %v33
    %v54 = vpop.permute.xlu0 %53
    %vm55 = vcmp.eq.s32.totalorder %v39, %v45
    %vm56 = vcmp.eq.s32.totalorder %v40, %v45
    %vm57 = vcmp.eq.s32.totalorder %v41, %v45
    %vm58 = vcmp.eq.s32.totalorder %v42, %v45
    %vm59 = vcmp.eq.s32.totalorder %v39, %v48
    %vm60 = vcmp.eq.s32.totalorder %v40, %v48
    %vm61 = vcmp.eq.s32.totalorder %v41, %v48
    %vm62 = vcmp.eq.s32.totalorder %v42, %v48
    %vm63 = vcmp.eq.s32.totalorder %v39, %v51
    %vm64 = vcmp.eq.s32.totalorder %v40, %v51
    %vm65 = vcmp.eq.s32.totalorder %v41, %v51
    %vm66 = vcmp.eq.s32.totalorder %v42, %v51
    %vm67 = vcmp.eq.s32.totalorder %v39, %v54
    %vm68 = vcmp.eq.s32.totalorder %v40, %v54
    %vm69 = vcmp.eq.s32.totalorder %v41, %v54
    %vm70 = vcmp.eq.s32.totalorder %v42, %v54
    %v71 = vsel %vm55, 1, 0
    %v72 = vsel %vm56, 1, 0
    %v73 = vsel %vm57, 1, 0
    %v74 = vsel %vm58, 1, 0
    %v75 = vsel %vm59, 1, 0
    %v76 = vsel %vm60, 1, 0
    %v77 = vsel %vm61, 1, 0
    %v78 = vsel %vm62, 1, 0
    %v79 = vsel %vm63, 1, 0
    %v80 = vsel %vm64, 1, 0
    %v81 = vsel %vm65, 1, 0
    %v82 = vsel %vm66, 1, 0
    %v83 = vsel %vm67, 1, 0
    %v84 = vsel %vm68, 1, 0
    %v85 = vsel %vm69, 1, 0
    %v86 = vsel %vm70, 1, 0
    %v87 = vcvt.s32.f32 %v71
    %v88 = vcvt.s32.f32 %v72
    %v89 = vcvt.s32.f32 %v73
    %v90 = vcvt.s32.f32 %v74
    %v91 = vcvt.s32.f32 %v75
    %v92 = vcvt.s32.f32 %v76
    %v93 = vcvt.s32.f32 %v77
    %v94 = vcvt.s32.f32 %v78
    %v95 = vcvt.s32.f32 %v79
    %v96 = vcvt.s32.f32 %v80
    %v97 = vcvt.s32.f32 %v81
    %v98 = vcvt.s32.f32 %v82
    %v99 = vcvt.s32.f32 %v83
    %v100 = vcvt.s32.f32 %v84
    %v101 = vcvt.s32.f32 %v85
    %v102 = vcvt.s32.f32 %v86
    %v103 = vpack.c.bf16 %v91, %v87
    %v104 = vpack.c.bf16 %v92, %v88
    %v105 = vpack.c.bf16 %v93, %v89
    %v106 = vpack.c.bf16 %v94, %v90
    %v107 = vpack.c.bf16 %v99, %v95
    %v108 = vpack.c.bf16 %v100, %v96
    %v109 = vpack.c.bf16 %v101, %v97
    %v110 = vpack.c.bf16 %v102, %v98
    %v111 = vld [vmem:[#allocation2] sm:$0xff]
    %v112 = vld [vmem:[#allocation2 + $0x8] sm:$0xff]
    %v113 = vld [vmem:[#allocation2 + $0x10] sm:$0xff]
    %v114 = vld [vmem:[#allocation2 + $0x18] sm:$0xff]
    %v115 = vld [vmem:[#allocation3] sm:$0xf]
    %v116 = vld [vmem:[#allocation3 + $0x4] sm:$0xf]
    %v117 = vld [vmem:[#allocation3 + $0x8] sm:$0xf]
    %v118 = vld [vmem:[#allocation3 + $0xc] sm:$0xf]
    %v119 = vld [vmem:[#allocation3 + $0x10] sm:$0xf]
    %v120 = vld [vmem:[#allocation3 + $0x14] sm:$0xf]
    %v121 = vld [vmem:[#allocation3 + $0x18] sm:$0xf]
    %v122 = vld [vmem:[#allocation3 + $0x1c] sm:$0xf]
    %v123 = vld [vmem:[#allocation3 + $0x20] sm:$0xf]
    %v124 = vld [vmem:[#allocation3 + $0x24] sm:$0xf]
    %v125 = vld [vmem:[#allocation3 + $0x28] sm:$0xf]
    %v126 = vld [vmem:[#allocation3 + $0x2c] sm:$0xf]
    %v127 = vld [vmem:[#allocation3 + $0x30] sm:$0xf]
    %v128 = vld [vmem:[#allocation3 + $0x34] sm:$0xf]
    %v129 = vld [vmem:[#allocation3 + $0x38] sm:$0xf]
    %v130 = vld [vmem:[#allocation3 + $0x3c] sm:$0xf]
    %v131 = vld [vmem:[#allocation3 + $0x40] sm:$0xf]
    %v132 = vld [vmem:[#allocation3 + $0x44] sm:$0xf]
    %v133 = vld [vmem:[#allocation3 + $0x48] sm:$0xf]
    %v134 = vld [vmem:[#allocation3 + $0x4c] sm:$0xf]
    %v135 = vld [vmem:[#allocation3 + $0x50] sm:$0xf]
    %v136 = vld [vmem:[#allocation3 + $0x54] sm:$0xf]
    %v137 = vld [vmem:[#allocation3 + $0x58] sm:$0xf]
    %v138 = vld [vmem:[#allocation3 + $0x5c] sm:$0xf]
    %v139 = vld [vmem:[#allocation3 + $0x60] sm:$0xf]
    %v140 = vld [vmem:[#allocation3 + $0x64] sm:$0xf]
    %v141 = vld [vmem:[#allocation3 + $0x68] sm:$0xf]
    %v142 = vld [vmem:[#allocation3 + $0x6c] sm:$0xf]
    %v143 = vld [vmem:[#allocation3 + $0x70] sm:$0xf]
    %v144 = vld [vmem:[#allocation3 + $0x74] sm:$0xf]
    %v145 = vld [vmem:[#allocation3 + $0x78] sm:$0xf]
    %v146 = vld [vmem:[#allocation3 + $0x7c] sm:$0xf]
    %v147 = vld [vmem:[#allocation3 + $0x80] sm:$0xf]
    %v148 = vld [vmem:[#allocation3 + $0x84] sm:$0xf]
    %v149 = vld [vmem:[#allocation3 + $0x88] sm:$0xf]
    %v150 = vld [vmem:[#allocation3 + $0x8c] sm:$0xf]
    %v151 = vld [vmem:[#allocation3 + $0x90] sm:$0xf]
    %v152 = vld [vmem:[#allocation3 + $0x94] sm:$0xf]
    %v153 = vld [vmem:[#allocation3 + $0x98] sm:$0xf]
    %v154 = vld [vmem:[#allocation3 + $0x9c] sm:$0xf]
    %v155 = vld [vmem:[#allocation3 + $0xa0] sm:$0xf]
    %v156 = vld [vmem:[#allocation3 + $0xa4] sm:$0xf]
    %v157 = vld [vmem:[#allocation3 + $0xa8] sm:$0xf]
    %v158 = vld [vmem:[#allocation3 + $0xac] sm:$0xf]
    %v159 = vld [vmem:[#allocation3 + $0xb0] sm:$0xf]
    %v160 = vld [vmem:[#allocation3 + $0xb4] sm:$0xf]
    %v161 = vld [vmem:[#allocation3 + $0xb8] sm:$0xf]
    %v162 = vld [vmem:[#allocation3 + $0xbc] sm:$0xf]
    %v163 = vld [vmem:[#allocation3 + $0xc0] sm:$0xf]
    %v164 = vld [vmem:[#allocation3 + $0xc4] sm:$0xf]
    %v165 = vld [vmem:[#allocation3 + $0xc8] sm:$0xf]
    %v166 = vld [vmem:[#allocation3 + $0xcc] sm:$0xf]
    %v167 = vld [vmem:[#allocation3 + $0xd0] sm:$0xf]
    %v168 = vld [vmem:[#allocation3 + $0xd4] sm:$0xf]
    %v169 = vld [vmem:[#allocation3 + $0xd8] sm:$0xf]
    %v170 = vld [vmem:[#allocation3 + $0xdc] sm:$0xf]
    %v171 = vld [vmem:[#allocation3 + $0xe0] sm:$0xf]
    %v172 = vld [vmem:[#allocation3 + $0xe4] sm:$0xf]
    %v173 = vld [vmem:[#allocation3 + $0xe8] sm:$0xf]
    %v174 = vld [vmem:[#allocation3 + $0xec] sm:$0xf]
    %v175 = vld [vmem:[#allocation3 + $0xf0] sm:$0xf]
    %v176 = vld [vmem:[#allocation3 + $0xf4] sm:$0xf]
    %v177 = vld [vmem:[#allocation3 + $0xf8] sm:$0xf]
    %v178 = vld [vmem:[#allocation3 + $0xfc] sm:$0xf]
    %v243 = vunpack.c.l.b16 %v115
    %v244 = vunpack.c.l.b16 %v116
    %v245 = vunpack.c.l.b16 %v117
    %v246 = vunpack.c.l.b16 %v118
    %v247 = vunpack.c.l.b16 %v119
    %v248 = vunpack.c.l.b16 %v120
    %v249 = vunpack.c.l.b16 %v121
    %v250 = vunpack.c.l.b16 %v122
    %v251 = vunpack.c.l.b16 %v123
    %v252 = vunpack.c.l.b16 %v124
    %v253 = vunpack.c.l.b16 %v125
    %v254 = vunpack.c.l.b16 %v126
    %v255 = vunpack.c.l.b16 %v127
    %v256 = vunpack.c.l.b16 %v128
    %v257 = vunpack.c.l.b16 %v129
    %v258 = vunpack.c.l.b16 %v130
    %v259 = vunpack.c.l.b16 %v131
    %v260 = vunpack.c.l.b16 %v132
    %v261 = vunpack.c.l.b16 %v133
    %v262 = vunpack.c.l.b16 %v134
    %v263 = vunpack.c.l.b16 %v135
    %v264 = vunpack.c.l.b16 %v136
    %v265 = vunpack.c.l.b16 %v137
    %v266 = vunpack.c.l.b16 %v138
    %v267 = vunpack.c.l.b16 %v139
    %v268 = vunpack.c.l.b16 %v140
    %v269 = vunpack.c.l.b16 %v141
    %v270 = vunpack.c.l.b16 %v142
    %v271 = vunpack.c.l.b16 %v143
    %v272 = vunpack.c.l.b16 %v144
    %v273 = vunpack.c.l.b16 %v145
    %v274 = vunpack.c.l.b16 %v146
    %v275 = vunpack.c.l.b16 %v147
    %v276 = vunpack.c.l.b16 %v148
    %v277 = vunpack.c.l.b16 %v149
    %v278 = vunpack.c.l.b16 %v150
    %v279 = vunpack.c.l.b16 %v151
    %v280 = vunpack.c.l.b16 %v152
    %v281 = vunpack.c.l.b16 %v153
    %v282 = vunpack.c.l.b16 %v154
    %v283 = vunpack.c.l.b16 %v155
    %v284 = vunpack.c.l.b16 %v156
    %v285 = vunpack.c.l.b16 %v157
    %v286 = vunpack.c.l.b16 %v158
    %v287 = vunpack.c.l.b16 %v159
    %v288 = vunpack.c.l.b16 %v160
    %v289 = vunpack.c.l.b16 %v161
    %v290 = vunpack.c.l.b16 %v162
    %v291 = vunpack.c.l.b16 %v163
    %v292 = vunpack.c.l.b16 %v164
    %v293 = vunpack.c.l.b16 %v165
    %v294 = vunpack.c.l.b16 %v166
    %v295 = vunpack.c.l.b16 %v167
    %v296 = vunpack.c.l.b16 %v168
    %v297 = vunpack.c.l.b16 %v169
    %v298 = vunpack.c.l.b16 %v170
    %v299 = vunpack.c.l.b16 %v171
    %v300 = vunpack.c.l.b16 %v172
    %v301 = vunpack.c.l.b16 %v173
    %v302 = vunpack.c.l.b16 %v174
    %v303 = vunpack.c.l.b16 %v175
    %v304 = vunpack.c.l.b16 %v176
    %v305 = vunpack.c.l.b16 %v177
    %v306 = vunpack.c.l.b16 %v178
    %v307 = vpack.c.b16 %v244, %v243
    %v308 = vpack.c.b16 %v246, %v245
    %v309 = vpack.c.b16 %v248, %v247
    %v310 = vpack.c.b16 %v250, %v249
    %v311 = vpack.c.b16 %v252, %v251
    %v312 = vpack.c.b16 %v254, %v253
    %v313 = vpack.c.b16 %v256, %v255
    %v314 = vpack.c.b16 %v258, %v257
    %v315 = vpack.c.b16 %v260, %v259
    %v316 = vpack.c.b16 %v262, %v261
    %v317 = vpack.c.b16 %v264, %v263
    %v318 = vpack.c.b16 %v266, %v265
    %v319 = vpack.c.b16 %v268, %v267
    %v320 = vpack.c.b16 %v270, %v269
    %v321 = vpack.c.b16 %v272, %v271
    %v322 = vpack.c.b16 %v274, %v273
    %v323 = vpack.c.b16 %v276, %v275
    %v324 = vpack.c.b16 %v278, %v277
    %v325 = vpack.c.b16 %v280, %v279
    %v326 = vpack.c.b16 %v282, %v281
    %v327 = vpack.c.b16 %v284, %v283
    %v328 = vpack.c.b16 %v286, %v285
    %v329 = vpack.c.b16 %v288, %v287
    %v330 = vpack.c.b16 %v290, %v289
    %v331 = vpack.c.b16 %v292, %v291
    %v332 = vpack.c.b16 %v294, %v293
    %v333 = vpack.c.b16 %v296, %v295
    %v334 = vpack.c.b16 %v298, %v297
    %v335 = vpack.c.b16 %v300, %v299
    %v336 = vpack.c.b16 %v302, %v301
    %v337 = vpack.c.b16 %v304, %v303
    %v338 = vpack.c.b16 %v306, %v305
    %371 = vmatprep.subr.bf16.mxu0 0
    %372 = vmatpush1.bf16.msra.mxu0 %v314
    %373 = vmatprep.subr.bf16.mxu0 0
    %374 = vmatpush1.bf16.msra.mxu0 %v313
    %375 = vmatprep.subr.bf16.mxu0 0
    %376 = vmatpush1.bf16.msra.mxu0 %v312
    %377 = vmatprep.subr.bf16.mxu0 0
    %378 = vmatpush1.bf16.msra.mxu0 %v311
    %379 = vmatprep.subr.bf16.mxu0 0
    %380 = vmatpush1.bf16.msra.mxu0 %v310
    %381 = vmatprep.subr.bf16.mxu0 0
    %382 = vmatpush1.bf16.msra.mxu0 %v309
    %383 = vmatprep.subr.bf16.mxu0 0
    %384 = vmatpush1.bf16.msra.mxu0 %v308
    %385 = vmatprep.subr.bf16.mxu0 0
    %386 = vmatpush1.bf16.msra.mxu0 %v307
    %387 = vmatprep.subr.bf16.mxu0 0
    %388 = vmatpush2.bf16.msra.mxu0 %v322
    %389 = vmatprep.subr.bf16.mxu0 0
    %390 = vmatpush2.bf16.msra.mxu0 %v321
    %391 = vmatprep.subr.bf16.mxu0 0
    %392 = vmatpush2.bf16.msra.mxu0 %v320
    %393 = vmatprep.subr.bf16.mxu0 0
    %394 = vmatpush2.bf16.msra.mxu0 %v319
    %395 = vmatprep.subr.bf16.mxu0 0
    %396 = vmatpush2.bf16.msra.mxu0 %v318
    %397 = vmatprep.subr.bf16.mxu0 0
    %398 = vmatpush2.bf16.msra.mxu0 %v317
    %399 = vmatprep.subr.bf16.mxu0 0
    %400 = vmatpush2.bf16.msra.mxu0 %v316
    %401 = vmatprep.subr.bf16.mxu0 0
    %402 = vmatpush2.bf16.msra.mxu0 %v315
    %403 = vmatprep.mubr.bf16.mxu0 %v104
    %404 = vmatmul.mubr.bf16.gmra.mxu0 %v103
    %v405 = vpop.f32.mrf.mxu0
    %v406 = vadd.f32 0.0, %v405
    %v407 = vpop.f32.mrf.mxu0
    %v408 = vpop.f32.mrf.mxu0
    %v409 = vadd.f32 0.0, %v408
    %v410 = vpop.f32.mrf.mxu0
    %411 = vmatprep.mubr.bf16.mxu0 %v108
    %412 = vmatmul.mubr.bf16.gmra.mxu0 %v107
    %v413 = vpop.f32.mrf.mxu0
    %v414 = vadd.f32 0.0, %v413
    %v415 = vpop.f32.mrf.mxu0
    %v416 = vpop.f32.mrf.mxu0
    %v417 = vadd.f32 0.0, %v416
    %v418 = vpop.f32.mrf.mxu0
    %419 = vdwg.mxu0
    %420 = vmatprep.subr.bf16.mxu0 0
    %421 = vmatpush1.bf16.msra.mxu0 %v330
    %422 = vmatprep.subr.bf16.mxu0 0
    %423 = vmatpush1.bf16.msra.mxu0 %v329
    %424 = vmatprep.subr.bf16.mxu0 0
    %425 = vmatpush1.bf16.msra.mxu0 %v328
    %426 = vmatprep.subr.bf16.mxu0 0
    %427 = vmatpush1.bf16.msra.mxu0 %v327
    %428 = vmatprep.subr.bf16.mxu0 0
    %429 = vmatpush1.bf16.msra.mxu0 %v326
    %430 = vmatprep.subr.bf16.mxu0 0
    %431 = vmatpush1.bf16.msra.mxu0 %v325
    %432 = vmatprep.subr.bf16.mxu0 0
    %433 = vmatpush1.bf16.msra.mxu0 %v324
    %434 = vmatprep.subr.bf16.mxu0 0
    %435 = vmatpush1.bf16.msra.mxu0 %v323
    %436 = vmatprep.subr.bf16.mxu0 0
    %437 = vmatpush2.bf16.msra.mxu0 %v338
    %438 = vmatprep.subr.bf16.mxu0 0
    %439 = vmatpush2.bf16.msra.mxu0 %v337
    %440 = vmatprep.subr.bf16.mxu0 0
    %441 = vmatpush2.bf16.msra.mxu0 %v336
    %442 = vmatprep.subr.bf16.mxu0 0
    %443 = vmatpush2.bf16.msra.mxu0 %v335
    %444 = vmatprep.subr.bf16.mxu0 0
    %445 = vmatpush2.bf16.msra.mxu0 %v334
    %446 = vmatprep.subr.bf16.mxu0 0
    %447 = vmatpush2.bf16.msra.mxu0 %v333
    %448 = vmatprep.subr.bf16.mxu0 0
    %449 = vmatpush2.bf16.msra.mxu0 %v332
    %450 = vmatprep.subr.bf16.mxu0 0
    %451 = vmatpush2.bf16.msra.mxu0 %v331
    %452 = vmatprep.mubr.bf16.mxu0 %v106
    %453 = vmatmul.mubr.bf16.gmra.mxu0 %v105
    %v454 = vpop.f32.mrf.mxu0
    %v455 = vadd.f32 %v406, %v454
    %v456 = vpop.f32.mrf.mxu0
    %v457 = vpop.f32.mrf.mxu0
    %v458 = vadd.f32 %v409, %v457
    %v459 = vpop.f32.mrf.mxu0
    %460 = vmatprep.mubr.bf16.mxu0 %v110
    %461 = vmatmul.mubr.bf16.gmra.mxu0 %v109
    %v462 = vpop.f32.mrf.mxu0
    %v463 = vadd.f32 %v414, %v462
    %v464 = vpop.f32.mrf.mxu0
    %v465 = vpop.f32.mrf.mxu0
    %v466 = vadd.f32 %v417, %v465
    %v467 = vpop.f32.mrf.mxu0
    %468 = vdwg.mxu0
    %v469 = vadd.f32 %v111, %v455
    %v470 = vadd.f32 %v112, %v458
    %v471 = vadd.f32 %v113, %v463
    %v472 = vadd.f32 %v114, %v466
    %473 = vst [vmem:[#allocation2] sm:$0xff] %v469
    %474 = vst [vmem:[#allocation2 + $0x8] sm:$0xff] %v470
    %475 = vst [vmem:[#allocation2 + $0x10] sm:$0xff] %v471
    %476 = vst [vmem:[#allocation2 + $0x18] sm:$0xff] %v472
    %v477 = vld [vmem:[#allocation2] sm:$0xff]
    %v478 = vld [vmem:[#allocation2 + $0x8] sm:$0xff]
    %v479 = vld [vmem:[#allocation2 + $0x10] sm:$0xff]
    %v480 = vld [vmem:[#allocation2 + $0x18] sm:$0xff]
    %v481 = vmul.f32 %v477, 11.313708
    %v482 = vmul.f32 %v478, 11.313708
    %v483 = vmul.f32 %v479, 11.313708
    %v484 = vmul.f32 %v480, 11.313708
    %v485 = vld [vmem:[%s2] sm:$0xff]
    %v486 = vld [vmem:[%s2 + $0x8] sm:$0xff]
    %v487 = vld [vmem:[%s2 + $0x10] sm:$0xff]
    %v488 = vld [vmem:[%s2 + $0x18] sm:$0xff]
    %v489 = vadd.f32 %v481, %v485
    %v490 = vadd.f32 %v482, %v486
    %v491 = vadd.f32 %v483, %v487
    %v492 = vadd.f32 %v484, %v488
    %493 = vst [vmem:[#allocation6] sm:$0xff] %v489
    %494 = vst [vmem:[#allocation6 + $0x8] sm:$0xff] %v490
    %495 = vst [vmem:[#allocation6 + $0x10] sm:$0xff] %v491
    %496 = vst [vmem:[#allocation6 + $0x18] sm:$0xff] %v492
    // Predicated region
    $region18: #{tpu_custom_call.1} parent=1 // pred_check
      _
    $region19: #{tpu_custom_call.1} parent=1 // pred_check_branch
      %498 = sbr.rel (0) target = $region21
    $region20: #{tpu_custom_call.1} parent=1 // pred_region
      %s500 = ssub.s32 512, 512
      %501 = vsyncadd [#allocation5], %s500
      %s502 = sshll.u32 [#allocation6], 4
      %s503 = int_to_ptr.vmem [resolvable:$true] %s502
      %508 = dma.vmem_to_hbm [thread:$0]  %s503, 512, %s3, [#allocation5], 128, 128, 8
    $region21: #{tpu_custom_call.1} parent=1 // pred_fallthru
      _
    // Predicated region
    $region22: #{tpu_custom_call.1} parent=1 // pred_check
      _
    $region23: #{tpu_custom_call.1} parent=1 // pred_check_branch
      %510 = sbr.rel (0) target = $region25
    $region24: #{tpu_custom_call.1} parent=1 // pred_region
      %511 = dma.done [#allocation5], 512
    $region25: #{tpu_custom_call.1} parent=1 // pred_fallthru
      _
    %512 = vsyncpa [#allocation4], 1
    %513 = vsyncpa [#allocation5], 1

</llo_original>
